<compile_context>
chip_gen: v7x
topology: tpu7x:2x2x1
jax: 0.10.0
libtpu: 0.0.40
codegen_flags: <defaults>
</compile_context>

<pallas_src>
import functools

import jax
import jax.numpy as jnp
from jax import lax
from jax.experimental import pallas as pl
from jax.experimental.pallas import tpu as pltpu


VMEM_LIMIT = 48 * 1024 * 1024  # > v5e/v6e scoped defaults, < v7x 64 MiB physical


def _pick_tile(dim, preferred, align):
    """Largest multiple of `align` <= `preferred` that divides `dim`, else full dim."""
    if dim <= preferred:
        return dim
    t = (preferred // align) * align
    while t >= align:
        if dim % t == 0:
            return t
        t -= align
    return dim


# ----------------------------------------------------------------------------
# Pallas kernels
# ----------------------------------------------------------------------------

def _matmul_affine_kernel(x_ref, w_ref, shift_ref, o_ref, acc_ref, *, relu):
    k = pl.program_id(2)

    @pl.when(k == 0)
    def _():
        acc_ref[...] = jnp.zeros_like(acc_ref)

    acc_ref[...] += jnp.dot(x_ref[...], w_ref[...],
                            preferred_element_type=jnp.float32)

    @pl.when(k == pl.num_programs(2) - 1)
    def _():
        y = acc_ref[...] + shift_ref[...]
        if relu:
            y = jnp.maximum(y, 0.0)
        o_ref[...] = y.astype(o_ref.dtype)


def _conv3x3_affine_relu_kernel(x_ref, w_ref, shift_ref, o_ref, acc_ref, *, H, W):
    # x_ref:     (1, H+2, W+2, tk)  bf16 (zero-padded NHWC block)
    # w_ref:     (9, tk, tn)        bf16 (BN scale folded in)
    # shift_ref: (1, tn)            f32
    # o_ref:     (1, H*W, tn)
    # acc_ref:   (H*W, tn)          f32
    k = pl.program_id(2)

    @pl.when(k == 0)
    def _():
        acc_ref[...] = jnp.zeros_like(acc_ref)

    # In-kernel im2col: 9 shifted windows of the padded block, each contracted
    # against the matching (tk, tn) weight tap.  Accumulate in a local f32 value
    # (one scratch load + one scratch store per grid step instead of 9 RMWs).
    acc = acc_ref[...]
    for t in range(9):
        kh, kw = divmod(t, 3)
        win = x_ref[0, kh:kh + H, kw:kw + W, :]          # (H, W, tk)
        win = win.reshape(H * W, win.shape[-1])          # (H*W, tk)
        acc = acc + jnp.dot(win, w_ref[t],
                            preferred_element_type=jnp.float32)
    acc_ref[...] = acc

    @pl.when(k == pl.num_programs(2) - 1)
    def _():
        y = jnp.maximum(acc_ref[...] + shift_ref[...], 0.0)
        o_ref[0] = y.astype(o_ref.dtype)


def _cam_attn_kernel(x_ref, attn_ref, acc_ref):
    # x_ref: (1, thw, C) bf16; acc_ref: (C, C) f32; attn_ref: (1, C, C) bf16 (attn^T)
    i = pl.program_id(1)

    @pl.when(i == 0)
    def _():
        acc_ref[...] = jnp.zeros_like(acc_ref)

    x = x_ref[0]                                          # (thw, C) bf16
    # energy[c, d] = sum_hw x[hw, c] * x[hw, d]  -> Gram matrix, contract over HW.
    # The small per-tile transpose is done through f32 (natively supported, exact).
    xt = jnp.transpose(x.astype(jnp.float32)).astype(jnp.bfloat16)   # (C, thw)
    acc_ref[...] += jnp.dot(xt, x, preferred_element_type=jnp.float32)

    @pl.when(i == pl.num_programs(1) - 1)
    def _():
        energy = acc_ref[...]
        energy_new = jnp.max(energy, axis=-1, keepdims=True) - energy
        m = jnp.max(energy_new, axis=-1, keepdims=True)
        p = jnp.exp(energy_new - m)
        attn = p / jnp.sum(p, axis=-1, keepdims=True)     # softmax(dim=-1), f32
        # Store transposed so the apply kernel uses a plain (K,N)-contraction dot.
        attn_ref[0] = jnp.transpose(attn).astype(attn_ref.dtype)


def _cam_apply_kernel(x_ref, attn_t_ref, gamma_ref, o_ref):
    x = x_ref[0]                                          # (thw, C) bf16
    attn_t = attn_t_ref[0]                                # (C, C)  bf16 (= attn^T)
    # out[hw, c] = sum_d attn[c, d] * x[hw, d] = (x @ attn^T)[hw, c]
    out = jnp.dot(x, attn_t, preferred_element_type=jnp.float32)
    o_ref[0] = (gamma_ref[0] * out + x.astype(jnp.float32)).astype(o_ref.dtype)


# ----------------------------------------------------------------------------
# Pallas wrappers
# ----------------------------------------------------------------------------

def matmul_affine(x2d, w2d, shift, *, relu, out_dtype, tm=256, tn=256, tk=512):
    """(M,K)@(K,N) + shift (+ ReLU); bf16 MXU operands, f32 accumulate/epilogue."""
    M, K = x2d.shape
    N = w2d.shape[1]
    tm = _pick_tile(M, tm, 8)
    tn = _pick_tile(N, tn, 128)
    tk = _pick_tile(K, tk, 128)
    kern = functools.partial(_matmul_affine_kernel, relu=relu)
    return pl.pallas_call(
        kern,
        out_shape=jax.ShapeDtypeStruct((M, N), out_dtype),
        grid=(M // tm, N // tn, K // tk),
        in_specs=[
            pl.BlockSpec((tm, tk), lambda i, j, k: (i, k)),
            pl.BlockSpec((tk, tn), lambda i, j, k: (k, j)),
            pl.BlockSpec((1, tn), lambda i, j, k: (0, j)),
        ],
        out_specs=pl.BlockSpec((tm, tn), lambda i, j, k: (i, j)),
        scratch_shapes=[pltpu.VMEM((tm, tn), jnp.float32)],
        compiler_params=pltpu.CompilerParams(
            dimension_semantics=("parallel", "parallel", "arbitrary"),
            vmem_limit_bytes=VMEM_LIMIT),
    )(x2d.astype(jnp.bfloat16), w2d.astype(jnp.bfloat16),
      shift.astype(jnp.float32))


def conv3x3_bn_relu(x_nhwc, w_oihw, scale, shift, *, out_dtype, tn=256, tk=256):
    """3x3 SAME conv (no bias) + folded-BN affine + ReLU.  Returns (B, H*W, N)."""
    B, H, W, C = x_nhwc.shape
    N = w_oihw.shape[0]
    tn = _pick_tile(N, tn, 128)
    tk = _pick_tile(C, tk, 128)
    # (N, C, 3, 3) -> (3, 3, C, N) -> (9, C, N); fold BN scale into output columns.
    w9 = jnp.transpose(w_oihw, (2, 3, 1, 0)).reshape(9, C, N)
    w9 = (w9 * scale.reshape(1, 1, N)).astype(jnp.bfloat16)
    xp = jnp.pad(x_nhwc, ((0, 0), (1, 1), (1, 1), (0, 0))).astype(jnp.bfloat16)
    kern = functools.partial(_conv3x3_affine_relu_kernel, H=H, W=W)
    return pl.pallas_call(
        kern,
        out_shape=jax.ShapeDtypeStruct((B, H * W, N), out_dtype),
        grid=(B, N // tn, C // tk),
        in_specs=[
            pl.BlockSpec((1, H + 2, W + 2, tk), lambda b, j, k: (b, 0, 0, k)),
            pl.BlockSpec((9, tk, tn), lambda b, j, k: (0, k, j)),
            pl.BlockSpec((1, tn), lambda b, j, k: (0, j)),
        ],
        out_specs=pl.BlockSpec((1, H * W, tn), lambda b, j, k: (b, 0, j)),
        scratch_shapes=[pltpu.VMEM((H * W, tn), jnp.float32)],
        compiler_params=pltpu.CompilerParams(
            dimension_semantics=("parallel", "parallel", "arbitrary"),
            vmem_limit_bytes=VMEM_LIMIT),
    )(xp, w9, shift.reshape(1, N).astype(jnp.float32))


def cam_module(x_bhw_c, gamma, *, out_dtype, thw=512):
    """CAM_Module channel attention on the (B, HW, C) layout (no transposes)."""
    B, HW, C = x_bhw_c.shape
    thw = _pick_tile(HW, thw, 8)
    x_bf = x_bhw_c.astype(jnp.bfloat16)

    attn_t = pl.pallas_call(
        _cam_attn_kernel,
        out_shape=jax.ShapeDtypeStruct((B, C, C), jnp.bfloat16),
        grid=(B, HW // thw),
        in_specs=[pl.BlockSpec((1, thw, C), lambda b, i: (b, i, 0))],
        out_specs=pl.BlockSpec((1, C, C), lambda b, i: (b, 0, 0)),
        scratch_shapes=[pltpu.VMEM((C, C), jnp.float32)],
        compiler_params=pltpu.CompilerParams(
            dimension_semantics=("parallel", "arbitrary"),
            vmem_limit_bytes=VMEM_LIMIT),
    )(x_bf)

    return pl.pallas_call(
        _cam_apply_kernel,
        out_shape=jax.ShapeDtypeStruct((B, HW, C), out_dtype),
        grid=(B, HW // thw),
        in_specs=[
            pl.BlockSpec((1, thw, C), lambda b, i: (b, i, 0)),
            pl.BlockSpec((1, C, C), lambda b, i: (b, 0, 0)),
            pl.BlockSpec(memory_space=pltpu.MemorySpace.SMEM),   # gamma scalar
        ],
        out_specs=pl.BlockSpec((1, thw, C), lambda b, i: (b, i, 0)),
        compiler_params=pltpu.CompilerParams(
            dimension_semantics=("parallel", "parallel"),
            vmem_limit_bytes=VMEM_LIMIT),
    )(x_bf, attn_t, gamma.reshape(1).astype(jnp.float32))


# ----------------------------------------------------------------------------
# Glue (BN folding, weight reshapes) in plain JAX
# ----------------------------------------------------------------------------

def _fold_bn(bn, eps=1e-5):
    scale = bn["gamma"] / jnp.sqrt(bn["var"] + eps)
    shift = bn["beta"] - bn["mean"] * scale
    return scale[None, :].astype(jnp.float32), shift[None, :].astype(jnp.float32)


def _w1x1_to_mat(w_oihw):
    return jnp.transpose(w_oihw[:, :, 0, 0], (1, 0))  # (Cin, Cout)


def ehil_block_forward(x_nchw, params):
    B, Cin, H, W = x_nchw.shape
    HW = H * W
    x = jnp.transpose(x_nchw, (0, 2, 3, 1))            # NHWC (only layout change)

    # conv_bn_relu1: 1x1 conv (no bias) + BN + ReLU  -> bf16 (B*HW, Ci)
    s1, b1 = _fold_bn(params["bn1"])
    w1 = _w1x1_to_mat(params["w1"]) * s1               # BN scale folded into weights
    y = matmul_affine(x.reshape(B * HW, Cin), w1, b1, relu=True,
                      out_dtype=jnp.bfloat16)
    Ci = y.shape[-1]

    # conv_bn_relu2: 3x3 conv + BN + ReLU (fused in-kernel im2col) -> bf16 (B, HW, Ci)
    s2, b2 = _fold_bn(params["bn2"])
    y = conv3x3_bn_relu(y.reshape(B, H, W, Ci), params["w2"], s2, b2,
                        out_dtype=jnp.bfloat16)

    # CAM channel attention, directly in the (B, HW, Ci) layout -> bf16
    y = cam_module(y, params["cam_gamma"], out_dtype=jnp.bfloat16)

    # conv_bn_relu3: 3x3 conv + BN + ReLU (fused in-kernel im2col) -> bf16
    s3, b3 = _fold_bn(params["bn3"])
    y = conv3x3_bn_relu(y.reshape(B, H, W, Ci), params["w3"], s3, b3,
                        out_dtype=jnp.bfloat16)

    # conv_out: Dropout2d(0.1) is identity in eval mode; 1x1 conv with bias.
    # Pad output channels to a multiple of 128 for lane-dense stores; slice outside.
    w_out = _w1x1_to_mat(params["w_out"])
    b_out = params["b_out"]
    Cout = w_out.shape[1]
    n_pad = -(-Cout // 128) * 128
    if n_pad != Cout:
        w_out = jnp.pad(w_out, ((0, 0), (0, n_pad - Cout)))
        b_out = jnp.pad(b_out, (0, n_pad - Cout))
    out = matmul_affine(y.reshape(B * HW, Ci), w_out, b_out[None, :],
                        relu=False, out_dtype=jnp.float32)[:, :Cout]
    return jnp.transpose(out.reshape(B, H, W, Cout), (0, 3, 1, 2))  # back to NCHW


# ----------------------------------------------------------------------------
# Pure-JAX f32 reference (independent of the Pallas kernels)
# ----------------------------------------------------------------------------

def reference_forward(x_nchw, params):
    x = jnp.transpose(x_nchw, (0, 2, 3, 1)).astype(jnp.float32)   # NHWC
    B, H, W, _ = x.shape

    def conv_bn_relu(xh, w_oihw, bn):
        w_hwio = jnp.transpose(w_oihw, (2, 3, 1, 0))
        y = lax.conv_general_dilated(
            xh, w_hwio, window_strides=(1, 1), padding="SAME",
            dimension_numbers=("NHWC", "HWIO", "NHWC"))
        s, b = _fold_bn(bn)
        return jnp.maximum(y * s.reshape(1, 1, 1, -1) + b.reshape(1, 1, 1, -1), 0.0)

    y = conv_bn_relu(x, params["w1"], params["bn1"])
    y = conv_bn_relu(y, params["w2"], params["bn2"])
    Ci = y.shape[-1]

    xb = jnp.transpose(y, (0, 3, 1, 2)).reshape(B, Ci, H * W)     # (B, C, HW)
    energy = jnp.einsum("bce,bde->bcd", xb, xb)
    energy_new = jnp.max(energy, axis=-1, keepdims=True) - energy
    attn = jax.nn.softmax(energy_new, axis=-1)
    out = jnp.einsum("bcd,bde->bce", attn, xb)
    xb = params["cam_gamma"].reshape(()) * out + xb
    y = jnp.transpose(xb.reshape(B, Ci, H, W), (0, 2, 3, 1))

    y = conv_bn_relu(y, params["w3"], params["bn3"])
    out = jnp.einsum("bhwc,co->bhwo", y, _w1x1_to_mat(params["w_out"])) + params["b_out"]
    return jnp.transpose(out, (0, 3, 1, 2))


# ----------------------------------------------------------------------------
# Parameter init + test
# ----------------------------------------------------------------------------

def init_params(key, in_channels, inter_channels, out_channels):
    ks = jax.random.split(key, 16)

    def bn(kg, kb, km, kv, c):
        return {
            "gamma": jax.random.uniform(kg, (c,), jnp.float32, 0.8, 1.2),
            "beta": 0.1 * jax.random.normal(kb, (c,), jnp.float32),
            "mean": 0.1 * jax.random.normal(km, (c,), jnp.float32),
            "var": jax.random.uniform(kv, (c,), jnp.float32, 0.5, 1.5),
        }

    return {
        "w1": 0.05 * jax.random.normal(ks[0], (inter_channels, in_channels, 1, 1), jnp.float32),
        "bn1": bn(ks[1], ks[2], ks[3], ks[4], inter_channels),
        "w2": 0.05 * jax.random.normal(ks[5], (inter_channels, inter_channels, 3, 3), jnp.float32),
        "bn2": bn(ks[6], ks[7], ks[8], ks[9], inter_channels),
        # PyTorch inits CAM gamma to 0; use 0.5 so the attention path is exercised.
        "cam_gamma": jnp.full((1,), 0.5, jnp.float32),
        "w3": 0.05 * jax.random.normal(ks[10], (inter_channels, inter_channels, 3, 3), jnp.float32),
        "bn3": bn(ks[11], ks[12], ks[13], ks[14], inter_channels),
        "w_out": 0.05 * jax.random.normal(ks[15], (out_channels, inter_channels, 1, 1), jnp.float32),
        "b_out": jnp.linspace(-0.1, 0.1, out_channels, dtype=jnp.float32),
    }


if __name__ == "__main__":
    B, Cin, H, W = 2, 4, 16, 16
    inter_channels = 32   # module hard-codes 1024; shrunk for the synthetic test
    Cout = 4

    key = jax.random.PRNGKey(0)
    kx, kp = jax.random.split(key)
    x = jax.random.normal(kx, (B, Cin, H, W), jnp.float32)
    params = init_params(kp, Cin, inter_channels, Cout)

    out = jax.block_until_ready(ehil_block_forward(x, params))
    ref = jax.block_until_ready(reference_forward(x, params))

    assert out.shape == (B, Cout, H, W)
    max_err = float(jnp.max(jnp.abs(out - ref)))
    # Tolerance sized for bf16 MXU operands / bf16 intermediate activations.
    assert jnp.allclose(out, ref, rtol=2e-2, atol=2e-2), (
        f"Pallas output mismatch vs reference (max abs err={max_err:.4e})")

    print("KERNEL_OK")
</pallas_src>

<mosaic_0001>
module attributes {stable_mosaic.version = 11 : i64} {
  func.func @_matmul_affine_kernel(%arg0: i32, %arg1: i32, %arg2: i32, %arg3: memref<256x4xbf16, #tpu.memory_space<vmem>>, %arg4: memref<4x32xbf16, #tpu.memory_space<vmem>>, %arg5: memref<1x32xf32, #tpu.memory_space<vmem>>, %arg6: memref<256x32xbf16, #tpu.memory_space<vmem>>, %arg7: memref<256x32xf32, #tpu.memory_space<vmem>>) attributes {dimension_semantics = [#tpu.dimension_semantics<parallel>, #tpu.dimension_semantics<parallel>, #tpu.dimension_semantics<arbitrary>], iteration_bounds = array<i64: 2, 1, 1>, scalar_prefetch = 0 : i64, scratch_operands = 1 : i64, tpu.core_type = #tpu.core_type<tc>, window_params = [{transform_indices = @transform_0, window_bounds = array<i64: 256, 4>}, {transform_indices = @transform_1, window_bounds = array<i64: 4, 32>}, {transform_indices = @transform_2, window_bounds = array<i64: 1, 32>}, {transform_indices = @transform_3, window_bounds = array<i64: 256, 32>}]} {
    %c0_i32 = arith.constant 0 : i32
    %0 = arith.cmpi eq, %arg2, %c0_i32 : i32
    %1 = arith.extui %0 : i1 to i32
    %c0_i32_0 = arith.constant 0 : i32
    %2 = arith.cmpi ne, %1, %c0_i32_0 : i32
    scf.if %2 {
      %cst_10 = arith.constant 0.000000e+00 : f32
      %12 = vector.broadcast %cst_10 : f32 to vector<256x32xf32>
      %c0_11 = arith.constant 0 : index
      %c0_12 = arith.constant 0 : index
      %13 = vector.load %arg7[%c0_11, %c0_12] : memref<256x32xf32, #tpu.memory_space<vmem>>, vector<256x32xf32>
      tpu.vector_store %arg7[%c0_11, %c0_12], %12 {strides = array<i32>} : memref<256x32xf32, #tpu.memory_space<vmem>>, vector<256x32xf32>,
    } else {
    }
    %c0 = arith.constant 0 : index
    %c0_1 = arith.constant 0 : index
    %3 = vector.load %arg7[%c0, %c0_1] : memref<256x32xf32, #tpu.memory_space<vmem>>, vector<256x32xf32>
    %c0_2 = arith.constant 0 : index
    %c0_3 = arith.constant 0 : index
    %4 = vector.load %arg3[%c0_2, %c0_3] : memref<256x4xbf16, #tpu.memory_space<vmem>>, vector<256x4xbf16>
    %c0_4 = arith.constant 0 : index
    %c0_5 = arith.constant 0 : index
    %5 = vector.load %arg4[%c0_4, %c0_5] : memref<4x32xbf16, #tpu.memory_space<vmem>>, vector<4x32xbf16>
    %cst = arith.constant dense<0.000000e+00> : vector<256x32xf32>
    %6 = tpu.matmul %4, %5, %cst {dimension_numbers = #tpu.dot_dimension_numbers<[1], [0], [0], [1], [0, 0, 1, 1], [], []>} : vector<256x4xbf16>, vector<4x32xbf16>, vector<256x32xf32> -> vector<256x32xf32>
    %7 = arith.addf %3, %6 : vector<256x32xf32>
    %c0_6 = arith.constant 0 : index
    %c0_7 = arith.constant 0 : index
    %8 = vector.load %arg7[%c0_6, %c0_7] : memref<256x32xf32, #tpu.memory_space<vmem>>, vector<256x32xf32>
    tpu.vector_store %arg7[%c0_6, %c0_7], %7 {strides = array<i32>} : memref<256x32xf32, #tpu.memory_space<vmem>>, vector<256x32xf32>,
    %c0_i32_8 = arith.constant 0 : i32
    %9 = arith.cmpi eq, %arg2, %c0_i32_8 : i32
    %10 = arith.extui %9 : i1 to i32
    %c0_i32_9 = arith.constant 0 : i32
    %11 = arith.cmpi ne, %10, %c0_i32_9 : i32
    scf.if %11 {
      %c0_10 = arith.constant 0 : index
      %c0_11 = arith.constant 0 : index
      %12 = vector.load %arg7[%c0_10, %c0_11] : memref<256x32xf32, #tpu.memory_space<vmem>>, vector<256x32xf32>
      %c0_12 = arith.constant 0 : index
      %c0_13 = arith.constant 0 : index
      %13 = vector.load %arg5[%c0_12, %c0_13] : memref<1x32xf32, #tpu.memory_space<vmem>>, vector<1x32xf32>
      %14 = vector.broadcast %13 : vector<1x32xf32> to vector<256x32xf32>
      %15 = arith.addf %12, %14 : vector<256x32xf32>
      %cst_14 = arith.constant 0.000000e+00 : f32
      %16 = vector.broadcast %cst_14 : f32 to vector<256x32xf32>
      %17 = arith.maximumf %15, %16 : vector<256x32xf32>
      %18 = arith.truncf %17 : vector<256x32xf32> to vector<256x32xbf16>
      %c0_15 = arith.constant 0 : index
      %c0_16 = arith.constant 0 : index
      %19 = vector.load %arg6[%c0_15, %c0_16] : memref<256x32xbf16, #tpu.memory_space<vmem>>, vector<256x32xbf16>
      tpu.vector_store %arg6[%c0_15, %c0_16], %18 {strides = array<i32>} : memref<256x32xbf16, #tpu.memory_space<vmem>>, vector<256x32xbf16>,
    } else {
    }
    return
  }
  func.func @transform_0(%arg0: i32, %arg1: i32, %arg2: i32) -> (i32, i32) {
    %c0_i32 = arith.constant 0 : i32
    return %arg0, %arg2 : i32, i32
  }
  func.func @transform_1(%arg0: i32, %arg1: i32, %arg2: i32) -> (i32, i32) {
    %c0_i32 = arith.constant 0 : i32
    return %arg2, %arg1 : i32, i32
  }
  func.func @transform_2(%arg0: i32, %arg1: i32, %arg2: i32) -> (i32, i32) {
    %c0_i32 = arith.constant 0 : i32
    %c0_i32_0 = arith.constant 0 : i32
    return %c0_i32, %arg1 : i32, i32
  }
  func.func @transform_3(%arg0: i32, %arg1: i32, %arg2: i32) -> (i32, i32) {
    %c0_i32 = arith.constant 0 : i32
    return %arg0, %arg1 : i32, i32
  }
}

</mosaic_0001>

<llo_original>
// kernel: tpu_custom_call.1
$region0: #{tpu_custom_call.1}
  #allocation0 [shape = 'u32[]', space=smem, size = 0x4, offset = 0x4, fixed_abs, tag = 'smem constant byte address 0x4 - core index']
  #allocation1 [shape = 'u32[144,128]{1,0:T(1,128)}', space=vmem, size = 0x12000, scoped, tag = 'internal scratch']
  #allocation2 [shape = 'f32[256,32]{1,0:T(8,128)}', space=vmem, size = 0x20000, scoped, tag = 'scratch operand']
  %s0 = inlined_call_operand.vmem [shape: bf16[512,4], index: 0, kind: input, shape index: {}]
  %s1 = inlined_call_operand.vmem [shape: bf16[4,32], index: 1, kind: input, shape index: {}]
  %s2 = inlined_call_operand.vmem [shape: f32[1,32], index: 2, kind: input, shape index: {}]
  %s3 = inlined_call_operand.vmem [shape: bf16[512,32], index: 3, kind: output, shape index: {}]
  %s4 = sld [smem:[#allocation0]]
  $region53: #{tpu_custom_call.1} parent=0
    _
  %s6 = ssub.s32 1, %s4
  %s7 = scalar_select 0, %s6, %s4
  loop: start=0, step=1, limit=4
  $region2: #{tpu_custom_call.1} parent=0 // loop_pre_header
    _
  $region3: #{tpu_custom_call.1} parent=0 // loop_header
    %s9 = sphi 0, %s13
    %p10 = scmp.ge.s32.totalorder %s9, 4
    %s16 = sphi 0, %s35
    %s17 = sphi 0, %s31
    %s18 = sphi 0, %s27
    %s19 = sphi 0, %s16
    %s20 = sphi 0, %s17
    %s21 = sphi 0, %s18
    %s22 = sphi 0, %s19
    %s23 = sphi 0, %s20
    %s24 = sphi 0, %s21
    %s40 = sphi 0, %s42
    %s43 = sphi 0, %s40
    %s44 = sphi 0, %s43
    %s60 = sphi 0, %s44
    %s68 = sphi 0, %s70
    %s71 = sphi 0, %s68
    %s72 = sphi 0, %s71
    %s88 = sphi 0, %s72
    %s94 = sphi 0, %s96
    %s97 = sphi 0, %s94
    %s98 = sphi 0, %s97
    %s114 = sphi 0, %s98
    %s122 = sphi 0, %s124
    %s125 = sphi 0, %s122
    %s126 = sphi 0, %s125
    %s142 = sphi 0, %s126
  $region4: #{tpu_custom_call.1} parent=0 // loop_header_branch
    %12 = sbr.rel (%p10) target = $region8
  $region5: #{tpu_custom_call.1} parent=0 // loop_body
    %s14 = ssub.s32 %s9, 1
    %s15 = ssub.s32 %s9, 2
    %s25 = sadd.s32 1, %s18
    %p26 = scmp.ge.s32.totalorder %s25, 1
    %s27 = scalar_select %p26, 0, %s25
    %s28 = sadd.s32 1, %s17
    %s29 = scalar_select %p26, %s28, %s17
    %p30 = scmp.ge.s32.totalorder %s29, 1
    %s31 = scalar_select %p30, 0, %s29
    %s32 = sadd.s32 1, %s16
    %s33 = scalar_select %p30, %s32, %s16
    %p34 = scmp.ge.s32.totalorder %s33, 2
    %s35 = scalar_select %p34, 0, %s33
    %s36 = ssub.s32 %s16, %s35
    %s37 = ssub.s32 %s18, %s27
    %s38 = sor.u32 %s36, %s37
    %p39 = scmp.eq.s32.totalorder %s38, 0
    %s41 = sadd.s32 %s40, 1
    %s42 = scalar_select %p39, %s40, %s41
    %p45 = pneg %p39
    %p46 = scmp.eq.s32.totalorder %s9, 1
    %p47 = por %p45, %p46
    %p48 = scmp.ne.s32.totalorder %s40, %s43
    %p49 = scmp.eq.s32.totalorder %s9, 0
    %p50 = por %p48, %p49
    %p51 = scmp.ne.s32.totalorder %s40, %s43
    %p52 = scmp.eq.s32.totalorder %s14, 1
    %p53 = por %p51, %p52
    %p54 = scmp.ne.s32.totalorder %s43, %s44
    %p55 = scmp.eq.s32.totalorder %s14, 0
    %p56 = por %p54, %p55
    %p57 = scmp.ne.s32.totalorder %s43, %s44
    %p58 = scmp.eq.s32.totalorder %s15, 1
    %p59 = por %p57, %p58
    %p61 = scmp.ne.s32.totalorder %s44, %s60
    %p62 = scmp.eq.s32.totalorder %s15, 0
    %p63 = por %p61, %p62
    %s64 = ssub.s32 %s18, %s27
    %s65 = ssub.s32 %s17, %s31
    %s66 = sor.u32 %s64, %s65
    %p67 = scmp.eq.s32.totalorder %s66, 0
    %s69 = sadd.s32 %s68, 1
    %s70 = scalar_select %p67, %s68, %s69
    %p73 = pneg %p67
    %p74 = scmp.eq.s32.totalorder %s9, 1
    %p75 = por %p73, %p74
    %p76 = scmp.ne.s32.totalorder %s68, %s71
    %p77 = scmp.eq.s32.totalorder %s9, 0
    %p78 = por %p76, %p77
    %p79 = scmp.ne.s32.totalorder %s68, %s71
    %p80 = scmp.eq.s32.totalorder %s14, 1
    %p81 = por %p79, %p80
    %p82 = scmp.ne.s32.totalorder %s71, %s72
    %p83 = scmp.eq.s32.totalorder %s14, 0
    %p84 = por %p82, %p83
    %p85 = scmp.ne.s32.totalorder %s71, %s72
    %p86 = scmp.eq.s32.totalorder %s15, 1
    %p87 = por %p85, %p86
    %p89 = scmp.ne.s32.totalorder %s72, %s88
    %p90 = scmp.eq.s32.totalorder %s15, 0
    %p91 = por %p89, %p90
    %s92 = ssub.s32 %s17, %s31
    %p93 = scmp.eq.s32.totalorder %s92, 0
    %s95 = sadd.s32 %s94, 1
    %s96 = scalar_select %p93, %s94, %s95
    %p99 = pneg %p93
    %p100 = scmp.eq.s32.totalorder %s9, 1
    %p101 = por %p99, %p100
    %p102 = scmp.ne.s32.totalorder %s94, %s97
    %p103 = scmp.eq.s32.totalorder %s9, 0
    %p104 = por %p102, %p103
    %p105 = scmp.ne.s32.totalorder %s94, %s97
    %p106 = scmp.eq.s32.totalorder %s14, 1
    %p107 = por %p105, %p106
    %p108 = scmp.ne.s32.totalorder %s97, %s98
    %p109 = scmp.eq.s32.totalorder %s14, 0
    %p110 = por %p108, %p109
    %p111 = scmp.ne.s32.totalorder %s97, %s98
    %p112 = scmp.eq.s32.totalorder %s15, 1
    %p113 = por %p111, %p112
    %p115 = scmp.ne.s32.totalorder %s98, %s114
    %p116 = scmp.eq.s32.totalorder %s15, 0
    %p117 = por %p115, %p116
    %s118 = ssub.s32 %s16, %s35
    %s119 = ssub.s32 %s17, %s31
    %s120 = sor.u32 %s118, %s119
    %p121 = scmp.eq.s32.totalorder %s120, 0
    %s123 = sadd.s32 %s122, 1
    %s124 = scalar_select %p121, %s122, %s123
    %p127 = pneg %p121
    %p128 = scmp.eq.s32.totalorder %s9, 1
    %p129 = por %p127, %p128
    %p130 = scmp.ne.s32.totalorder %s122, %s125
    %p131 = scmp.eq.s32.totalorder %s9, 0
    %p132 = por %p130, %p131
    %p133 = scmp.ne.s32.totalorder %s122, %s125
    %p134 = scmp.eq.s32.totalorder %s14, 1
    %p135 = por %p133, %p134
    %p136 = scmp.ne.s32.totalorder %s125, %s126
    %p137 = scmp.eq.s32.totalorder %s14, 0
    %p138 = por %p136, %p137
    %p139 = scmp.ne.s32.totalorder %s125, %s126
    %p140 = scmp.eq.s32.totalorder %s15, 1
    %p141 = por %p139, %p140
    %p143 = scmp.ne.s32.totalorder %s126, %s142
    %p144 = scmp.eq.s32.totalorder %s15, 0
    %p145 = por %p143, %p144
    %p146 = scmp.le.s32.totalorder 1, %s9
    %p147 = scmp.lt.s32.totalorder %s9, 3
    %p148 = pnand %p146, %p147
    %p149 = pneg %p148
    // Predicated region
    $region9: #{tpu_custom_call.1} parent=5 // pred_check
      _
    $region10: #{tpu_custom_call.1} parent=5 // pred_check_branch
      %151 = sbr.rel (%p148) target = $region12
    $region11: #{tpu_custom_call.1} parent=5 // pred_region
      %s152 = ssub.s32 %s9, 1
      // Predicated region
      $region13: #{tpu_custom_call.1} parent=11 // pred_check
        %p153 = pneg %p84
      $region14: #{tpu_custom_call.1} parent=11 // pred_check_branch
        %155 = sbr.rel (%p153) target = $region16
      $region15: #{tpu_custom_call.1} parent=11 // pred_region
        %p156 = scmp.lt.s32.totalorder %s21, 0
        %s157 = scalar_select %p156, %s21, 0
        %p158 = scmp.lt.s32.totalorder %s20, 0
        %s159 = scalar_select %p158, %s20, 0
        %s160 = sadd.s32 %s159, %s157
        %s161 = smul.addr %s160, 2
        %s162 = scalar_lea.vmem %s1, %s161
      $region16: #{tpu_custom_call.1} parent=11 // pred_fallthru
        _
      // Predicated region
      $region17: #{tpu_custom_call.1} parent=11 // pred_check
        %p163 = pneg %p110
      $region18: #{tpu_custom_call.1} parent=11 // pred_check_branch
        %165 = sbr.rel (%p163) target = $region20
      $region19: #{tpu_custom_call.1} parent=11 // pred_region
        %p166 = scmp.lt.s32.totalorder %s20, 0
        %s167 = scalar_select %p166, %s20, 0
        %s168 = scalar_lea.vmem %s2, %s167
      $region20: #{tpu_custom_call.1} parent=11 // pred_fallthru
        _
    $region12: #{tpu_custom_call.1} parent=5 // pred_fallthru
      _
    %p169 = scmp.lt.s32.totalorder %s9, 2
    // Predicated region
    $region21: #{tpu_custom_call.1} parent=5 // pred_check
      %p170 = pneg %p169
    $region22: #{tpu_custom_call.1} parent=5 // pred_check_branch
      %172 = sbr.rel (%p170) target = $region24
    $region23: #{tpu_custom_call.1} parent=5 // pred_region
      // Predicated region
      $region25: #{tpu_custom_call.1} parent=23 // pred_check
        %p173 = pneg %p50
      $region26: #{tpu_custom_call.1} parent=23 // pred_check_branch
        %175 = sbr.rel (%p173) target = $region28
      $region27: #{tpu_custom_call.1} parent=23 // pred_region
        %s176 = smul.u32 32, %s16
        %p177 = scmp.lt.s32.totalorder %s176, 63
        %s178 = scalar_select %p177, %s176, 63
        %p179 = scmp.lt.s32.totalorder %s18, 0
        %s180 = scalar_select %p179, %s18, 0
        %s181 = sadd.s32 %s180, %s178
        %s182 = smul.addr %s181, 4
        %s183 = scalar_lea.vmem %s0, %s182
        %s184 = smul.u32 32, %s16
      $region28: #{tpu_custom_call.1} parent=23 // pred_fallthru
        _
    $region24: #{tpu_custom_call.1} parent=5 // pred_fallthru
      _
    %p185 = scmp.le.s32.totalorder 1, %s9
    %p186 = scmp.lt.s32.totalorder %s9, 3
    %p187 = pnand %p185, %p186
    %p188 = pneg %p187
    // Predicated region
    $region29: #{tpu_custom_call.1} parent=5 // pred_check
      _
    $region30: #{tpu_custom_call.1} parent=5 // pred_check_branch
      %190 = sbr.rel (%p187) target = $region32
    $region31: #{tpu_custom_call.1} parent=5 // pred_region
      %s191 = ssub.s32 %s9, 1
      %s192 = smul.u32 32, %s19
      %p193 = scmp.lt.s32.totalorder %s192, 63
      %s194 = scalar_select %p193, %s192, 63
      %p195 = scmp.lt.s32.totalorder %s21, 0
      %s196 = scalar_select %p195, %s21, 0
      %s197 = sadd.s32 %s196, %s194
      %s198 = smul.addr %s197, 4
      %s199 = scalar_lea.vmem %s0, %s198
      %p200 = pneg %p56
      %p201 = pneg %p53
      %p202 = scmp.lt.s32.totalorder %s21, 0
      %s203 = scalar_select %p202, %s21, 0
      %p204 = scmp.lt.s32.totalorder %s20, 0
      %s205 = scalar_select %p204, %s20, 0
      %s206 = sadd.s32 %s205, %s203
      %s207 = smul.addr %s206, 2
      %s208 = scalar_lea.vmem %s1, %s207
      %p209 = pneg %p84
      %p210 = pneg %p81
      %p211 = scmp.lt.s32.totalorder %s20, 0
      %s212 = scalar_select %p211, %s20, 0
      %s213 = scalar_lea.vmem %s2, %s212
      %p214 = pneg %p110
      %p215 = pneg %p107
      %p216 = pneg %p138
      %p217 = pneg %p135
      %s218 = smul.u32 32, %s19
      %p219 = scmp.lt.s32.totalorder %s218, 63
      %s220 = scalar_select %p219, %s218, 63
      %p221 = scmp.lt.s32.totalorder %s20, 0
      %s222 = scalar_select %p221, %s20, 0
      %s223 = sadd.s32 %s222, %s220
      %s224 = smul.addr %s223, 4
      %s225 = scalar_lea.vmem %s3, %s224
      %s226 = smul.u32 32, %s19
      %p227 = scmp.lt.s32.totalorder %s226, 63
      %s228 = scalar_select %p227, %s226, 63
      %p229 = scmp.lt.s32.totalorder %s21, 0
      %s230 = scalar_select %p229, %s21, 0
      %s231 = sadd.s32 %s230, %s228
      %s232 = smul.addr %s231, 4
      %s233 = scalar_lea.vmem %s0, %s232
      %s234 = smul.u32 32, %s19
      %p235 = scmp.lt.s32.totalorder %s21, 0
      %s236 = scalar_select %p235, %s21, 0
      %p237 = scmp.lt.s32.totalorder %s20, 0
      %s238 = scalar_select %p237, %s20, 0
      %s239 = sadd.s32 %s238, %s236
      %s240 = smul.addr %s239, 2
      %s241 = scalar_lea.vmem %s1, %s240
      %p242 = scmp.lt.s32.totalorder %s20, 0
      %s243 = scalar_select %p242, %s20, 0
      %s244 = scalar_lea.vmem %s2, %s243
      %s245 = smul.u32 32, %s19
      %p246 = scmp.lt.s32.totalorder %s245, 63
      %s247 = scalar_select %p246, %s245, 63
      %p248 = scmp.lt.s32.totalorder %s20, 0
      %s249 = scalar_select %p248, %s20, 0
      %s250 = sadd.s32 %s249, %s247
      %s251 = smul.addr %s250, 4
      %s252 = scalar_lea.vmem %s3, %s251
      %s253 = smul.u32 32, %s19
      %p255 = scmp.eq.s32.totalorder %s21, 0
      // Predicated region
      $region33: #{tpu_custom_call.1} parent=31 // pred_check
        %p256 = pneg %p255
      $region34: #{tpu_custom_call.1} parent=31 // pred_check_branch
        %258 = sbr.rel (%p256) target = $region36
      $region35: #{tpu_custom_call.1} parent=31 // pred_region
        %vm259 = vcmask 261120
        %260 = vst.msk [vmem:[#allocation2] sm:$0xff] %vm259, 0.0
        %261 = vst.msk [vmem:[#allocation2 + $0x8] sm:$0xff] %vm259, 0.0
        %262 = vst.msk [vmem:[#allocation2 + $0x10] sm:$0xff] %vm259, 0.0
        %263 = vst.msk [vmem:[#allocation2 + $0x18] sm:$0xff] %vm259, 0.0
        %264 = vst.msk [vmem:[#allocation2 + $0x20] sm:$0xff] %vm259, 0.0
        %265 = vst.msk [vmem:[#allocation2 + $0x28] sm:$0xff] %vm259, 0.0
        %266 = vst.msk [vmem:[#allocation2 + $0x30] sm:$0xff] %vm259, 0.0
        %267 = vst.msk [vmem:[#allocation2 + $0x38] sm:$0xff] %vm259, 0.0
        %268 = vst.msk [vmem:[#allocation2 + $0x40] sm:$0xff] %vm259, 0.0
        %269 = vst.msk [vmem:[#allocation2 + $0x48] sm:$0xff] %vm259, 0.0
        %270 = vst.msk [vmem:[#allocation2 + $0x50] sm:$0xff] %vm259, 0.0
        %271 = vst.msk [vmem:[#allocation2 + $0x58] sm:$0xff] %vm259, 0.0
        %272 = vst.msk [vmem:[#allocation2 + $0x60] sm:$0xff] %vm259, 0.0
        %273 = vst.msk [vmem:[#allocation2 + $0x68] sm:$0xff] %vm259, 0.0
        %274 = vst.msk [vmem:[#allocation2 + $0x70] sm:$0xff] %vm259, 0.0
        %275 = vst.msk [vmem:[#allocation2 + $0x78] sm:$0xff] %vm259, 0.0
        %276 = vst.msk [vmem:[#allocation2 + $0x80] sm:$0xff] %vm259, 0.0
        %277 = vst.msk [vmem:[#allocation2 + $0x88] sm:$0xff] %vm259, 0.0
        %278 = vst.msk [vmem:[#allocation2 + $0x90] sm:$0xff] %vm259, 0.0
        %279 = vst.msk [vmem:[#allocation2 + $0x98] sm:$0xff] %vm259, 0.0
        %280 = vst.msk [vmem:[#allocation2 + $0xa0] sm:$0xff] %vm259, 0.0
        %281 = vst.msk [vmem:[#allocation2 + $0xa8] sm:$0xff] %vm259, 0.0
        %282 = vst.msk [vmem:[#allocation2 + $0xb0] sm:$0xff] %vm259, 0.0
        %283 = vst.msk [vmem:[#allocation2 + $0xb8] sm:$0xff] %vm259, 0.0
        %284 = vst.msk [vmem:[#allocation2 + $0xc0] sm:$0xff] %vm259, 0.0
        %285 = vst.msk [vmem:[#allocation2 + $0xc8] sm:$0xff] %vm259, 0.0
        %286 = vst.msk [vmem:[#allocation2 + $0xd0] sm:$0xff] %vm259, 0.0
        %287 = vst.msk [vmem:[#allocation2 + $0xd8] sm:$0xff] %vm259, 0.0
        %288 = vst.msk [vmem:[#allocation2 + $0xe0] sm:$0xff] %vm259, 0.0
        %289 = vst.msk [vmem:[#allocation2 + $0xe8] sm:$0xff] %vm259, 0.0
        %290 = vst.msk [vmem:[#allocation2 + $0xf0] sm:$0xff] %vm259, 0.0
        %291 = vst.msk [vmem:[#allocation2 + $0xf8] sm:$0xff] %vm259, 0.0
      $region36: #{tpu_custom_call.1} parent=31 // pred_fallthru
        _
      %v292 = vld [vmem:[#allocation2] sm:$0xff]
      %v293 = vld [vmem:[#allocation2 + $0x8] sm:$0xff]
      %v294 = vld [vmem:[#allocation2 + $0x10] sm:$0xff]
      %v295 = vld [vmem:[#allocation2 + $0x18] sm:$0xff]
      %v296 = vld [vmem:[#allocation2 + $0x20] sm:$0xff]
      %v297 = vld [vmem:[#allocation2 + $0x28] sm:$0xff]
      %v298 = vld [vmem:[#allocation2 + $0x30] sm:$0xff]
      %v299 = vld [vmem:[#allocation2 + $0x38] sm:$0xff]
      %v300 = vld [vmem:[#allocation2 + $0x40] sm:$0xff]
      %v301 = vld [vmem:[#allocation2 + $0x48] sm:$0xff]
      %v302 = vld [vmem:[#allocation2 + $0x50] sm:$0xff]
      %v303 = vld [vmem:[#allocation2 + $0x58] sm:$0xff]
      %v304 = vld [vmem:[#allocation2 + $0x60] sm:$0xff]
      %v305 = vld [vmem:[#allocation2 + $0x68] sm:$0xff]
      %v306 = vld [vmem:[#allocation2 + $0x70] sm:$0xff]
      %v307 = vld [vmem:[#allocation2 + $0x78] sm:$0xff]
      %v308 = vld [vmem:[#allocation2 + $0x80] sm:$0xff]
      %v309 = vld [vmem:[#allocation2 + $0x88] sm:$0xff]
      %v310 = vld [vmem:[#allocation2 + $0x90] sm:$0xff]
      %v311 = vld [vmem:[#allocation2 + $0x98] sm:$0xff]
      %v312 = vld [vmem:[#allocation2 + $0xa0] sm:$0xff]
      %v313 = vld [vmem:[#allocation2 + $0xa8] sm:$0xff]
      %v314 = vld [vmem:[#allocation2 + $0xb0] sm:$0xff]
      %v315 = vld [vmem:[#allocation2 + $0xb8] sm:$0xff]
      %v316 = vld [vmem:[#allocation2 + $0xc0] sm:$0xff]
      %v317 = vld [vmem:[#allocation2 + $0xc8] sm:$0xff]
      %v318 = vld [vmem:[#allocation2 + $0xd0] sm:$0xff]
      %v319 = vld [vmem:[#allocation2 + $0xd8] sm:$0xff]
      %v320 = vld [vmem:[#allocation2 + $0xe0] sm:$0xff]
      %v321 = vld [vmem:[#allocation2 + $0xe8] sm:$0xff]
      %v322 = vld [vmem:[#allocation2 + $0xf0] sm:$0xff]
      %v323 = vld [vmem:[#allocation2 + $0xf8] sm:$0xff]
      %v324 = vld [vmem:[%s233] sm:$0xf]
      %v325 = vld [vmem:[%s233 + $0x4] sm:$0xf]
      %v326 = vld [vmem:[%s233 + $0x8] sm:$0xf]
      %v327 = vld [vmem:[%s233 + $0xc] sm:$0xf]
      %v328 = vld [vmem:[%s233 + $0x10] sm:$0xf]
      %v329 = vld [vmem:[%s233 + $0x14] sm:$0xf]
      %v330 = vld [vmem:[%s233 + $0x18] sm:$0xf]
      %v331 = vld [vmem:[%s233 + $0x1c] sm:$0xf]
      %v332 = vld [vmem:[%s233 + $0x20] sm:$0xf]
      %v333 = vld [vmem:[%s233 + $0x24] sm:$0xf]
      %v334 = vld [vmem:[%s233 + $0x28] sm:$0xf]
      %v335 = vld [vmem:[%s233 + $0x2c] sm:$0xf]
      %v336 = vld [vmem:[%s233 + $0x30] sm:$0xf]
      %v337 = vld [vmem:[%s233 + $0x34] sm:$0xf]
      %v338 = vld [vmem:[%s233 + $0x38] sm:$0xf]
      %v339 = vld [vmem:[%s233 + $0x3c] sm:$0xf]
      %v340 = vld [vmem:[%s233 + $0x40] sm:$0xf]
      %v341 = vld [vmem:[%s233 + $0x44] sm:$0xf]
      %v342 = vld [vmem:[%s233 + $0x48] sm:$0xf]
      %v343 = vld [vmem:[%s233 + $0x4c] sm:$0xf]
      %v344 = vld [vmem:[%s233 + $0x50] sm:$0xf]
      %v345 = vld [vmem:[%s233 + $0x54] sm:$0xf]
      %v346 = vld [vmem:[%s233 + $0x58] sm:$0xf]
      %v347 = vld [vmem:[%s233 + $0x5c] sm:$0xf]
      %v348 = vld [vmem:[%s233 + $0x60] sm:$0xf]
      %v349 = vld [vmem:[%s233 + $0x64] sm:$0xf]
      %v350 = vld [vmem:[%s233 + $0x68] sm:$0xf]
      %v351 = vld [vmem:[%s233 + $0x6c] sm:$0xf]
      %v352 = vld [vmem:[%s233 + $0x70] sm:$0xf]
      %v353 = vld [vmem:[%s233 + $0x74] sm:$0xf]
      %v354 = vld [vmem:[%s233 + $0x78] sm:$0xf]
      %v355 = vld [vmem:[%s233 + $0x7c] sm:$0xf]
      %v356 = vld [vmem:[%s241] sm:$0x3]
      %v389 = vunpack.c.l.b16 %v324
      %v390 = vunpack.c.l.b16 %v325
      %v391 = vunpack.c.l.b16 %v326
      %v392 = vunpack.c.l.b16 %v327
      %v393 = vunpack.c.l.b16 %v328
      %v394 = vunpack.c.l.b16 %v329
      %v395 = vunpack.c.l.b16 %v330
      %v396 = vunpack.c.l.b16 %v331
      %v397 = vunpack.c.l.b16 %v332
      %v398 = vunpack.c.l.b16 %v333
      %v399 = vunpack.c.l.b16 %v334
      %v400 = vunpack.c.l.b16 %v335
      %v401 = vunpack.c.l.b16 %v336
      %v402 = vunpack.c.l.b16 %v337
      %v403 = vunpack.c.l.b16 %v338
      %v404 = vunpack.c.l.b16 %v339
      %v405 = vunpack.c.l.b16 %v340
      %v406 = vunpack.c.l.b16 %v341
      %v407 = vunpack.c.l.b16 %v342
      %v408 = vunpack.c.l.b16 %v343
      %v409 = vunpack.c.l.b16 %v344
      %v410 = vunpack.c.l.b16 %v345
      %v411 = vunpack.c.l.b16 %v346
      %v412 = vunpack.c.l.b16 %v347
      %v413 = vunpack.c.l.b16 %v348
      %v414 = vunpack.c.l.b16 %v349
      %v415 = vunpack.c.l.b16 %v350
      %v416 = vunpack.c.l.b16 %v351
      %v417 = vunpack.c.l.b16 %v352
      %v418 = vunpack.c.l.b16 %v353
      %v419 = vunpack.c.l.b16 %v354
      %v420 = vunpack.c.l.b16 %v355
      %v421 = vpack.c.b16 %v390, %v389
      %v422 = vpack.c.b16 %v392, %v391
      %v423 = vpack.c.b16 %v394, %v393
      %v424 = vpack.c.b16 %v396, %v395
      %v425 = vpack.c.b16 %v398, %v397
      %v426 = vpack.c.b16 %v400, %v399
      %v427 = vpack.c.b16 %v402, %v401
      %v428 = vpack.c.b16 %v404, %v403
      %v429 = vpack.c.b16 %v406, %v405
      %v430 = vpack.c.b16 %v408, %v407
      %v431 = vpack.c.b16 %v410, %v409
      %v432 = vpack.c.b16 %v412, %v411
      %v433 = vpack.c.b16 %v414, %v413
      %v434 = vpack.c.b16 %v416, %v415
      %v435 = vpack.c.b16 %v418, %v417
      %v436 = vpack.c.b16 %v420, %v419
      %vm437 = vcmask 31744
      %v439 = vsel %vm437, %v421, 0
      %v442 = vsel %vm437, %v422, 0
      %v445 = vsel %vm437, %v423, 0
      %v448 = vsel %vm437, %v424, 0
      %v451 = vsel %vm437, %v425, 0
      %v454 = vsel %vm437, %v426, 0
      %v457 = vsel %vm437, %v427, 0
      %v460 = vsel %vm437, %v428, 0
      %v463 = vsel %vm437, %v429, 0
      %v466 = vsel %vm437, %v430, 0
      %v469 = vsel %vm437, %v431, 0
      %v472 = vsel %vm437, %v432, 0
      %v475 = vsel %vm437, %v433, 0
      %v478 = vsel %vm437, %v434, 0
      %v481 = vsel %vm437, %v435, 0
      %v484 = vsel %vm437, %v436, 0
      %vm486 = vcmask 1041408
      %v488 = vsel %vm486, %v356, 0
      %490 = vmatprep.subr.bf16.mxu0 0
      %491 = vmatpush1.bf16.msra.mxu0 %v488
      %492 = vmatprep.subr.bf16.mxu0 0
      %493 = vmatpush1.bf16.msra.mxu0 0
      %494 = vmatprep.subr.bf16.mxu0 0
      %495 = vmatpush1.bf16.msra.mxu0 0
      %496 = vmatprep.subr.bf16.mxu0 0
      %497 = vmatpush1.bf16.msra.mxu0 0
      %498 = vmatprep.subr.bf16.mxu0 0
      %499 = vmatpush1.bf16.msra.mxu0 0
      %500 = vmatprep.subr.bf16.mxu0 0
      %501 = vmatpush1.bf16.msra.mxu0 0
      %502 = vmatprep.subr.bf16.mxu0 0
      %503 = vmatpush1.bf16.msra.mxu0 0
      %504 = vmatprep.subr.bf16.mxu0 0
      %505 = vmatpush1.bf16.msra.mxu0 0
      %506 = vmatprep.subr.bf16.mxu0 0
      %507 = vmatpush1.bf16.msra.mxu0 0
      %508 = vmatprep.subr.bf16.mxu0 0
      %509 = vmatpush1.bf16.msra.mxu0 0
      %510 = vmatprep.subr.bf16.mxu0 0
      %511 = vmatpush1.bf16.msra.mxu0 0
      %512 = vmatprep.subr.bf16.mxu0 0
      %513 = vmatpush1.bf16.msra.mxu0 0
      %514 = vmatprep.subr.bf16.mxu0 0
      %515 = vmatpush1.bf16.msra.mxu0 0
      %516 = vmatprep.subr.bf16.mxu0 0
      %517 = vmatpush1.bf16.msra.mxu0 0
      %518 = vmatprep.subr.bf16.mxu0 0
      %519 = vmatpush1.bf16.msra.mxu0 0
      %520 = vmatprep.subr.bf16.mxu0 0
      %521 = vmatpush1.bf16.msra.mxu0 0
      %522 = vmatprep.mubr.bf16.mxu0 0
      %523 = vmatmul.mubr.bf16.gmra.mrb[0].mxu0 %v439
      %v524 = vpop.f32.mrb[0].mxu0
      %v525 = vadd.f32 0.0, %v524
      %v526 = vpop.f32.mrb[0].mxu0
      %v527 = vpop.f32.mrb[0].mxu0
      %v528 = vadd.f32 0.0, %v527
      %v529 = vpop.f32.mrb[0].mxu0
      %530 = vmatprep.mubr.bf16.mxu0 0
      %531 = vmatmul.mubr.bf16.gmra.mrb[0].mxu0 %v442
      %v532 = vpop.f32.mrb[0].mxu0
      %v533 = vadd.f32 0.0, %v532
      %v534 = vpop.f32.mrb[0].mxu0
      %v535 = vpop.f32.mrb[0].mxu0
      %v536 = vadd.f32 0.0, %v535
      %v537 = vpop.f32.mrb[0].mxu0
      %538 = vmatprep.mubr.bf16.mxu0 0
      %539 = vmatmul.mubr.bf16.gmra.mrb[0].mxu0 %v445
      %v540 = vpop.f32.mrb[0].mxu0
      %v541 = vadd.f32 0.0, %v540
      %v542 = vpop.f32.mrb[0].mxu0
      %v543 = vpop.f32.mrb[0].mxu0
      %v544 = vadd.f32 0.0, %v543
      %v545 = vpop.f32.mrb[0].mxu0
      %546 = vmatprep.mubr.bf16.mxu0 0
      %547 = vmatmul.mubr.bf16.gmra.mrb[0].mxu0 %v448
      %v548 = vpop.f32.mrb[0].mxu0
      %v549 = vadd.f32 0.0, %v548
      %v550 = vpop.f32.mrb[0].mxu0
      %v551 = vpop.f32.mrb[0].mxu0
      %v552 = vadd.f32 0.0, %v551
      %v553 = vpop.f32.mrb[0].mxu0
      %554 = vmatprep.mubr.bf16.mxu0 0
      %555 = vmatmul.mubr.bf16.gmra.mrb[0].mxu0 %v451
      %v556 = vpop.f32.mrb[0].mxu0
      %v557 = vadd.f32 0.0, %v556
      %v558 = vpop.f32.mrb[0].mxu0
      %v559 = vpop.f32.mrb[0].mxu0
      %v560 = vadd.f32 0.0, %v559
      %v561 = vpop.f32.mrb[0].mxu0
      %562 = vmatprep.mubr.bf16.mxu0 0
      %563 = vmatmul.mubr.bf16.gmra.mrb[0].mxu0 %v454
      %v564 = vpop.f32.mrb[0].mxu0
      %v565 = vadd.f32 0.0, %v564
      %v566 = vpop.f32.mrb[0].mxu0
      %v567 = vpop.f32.mrb[0].mxu0
      %v568 = vadd.f32 0.0, %v567
      %v569 = vpop.f32.mrb[0].mxu0
      %570 = vmatprep.mubr.bf16.mxu0 0
      %571 = vmatmul.mubr.bf16.gmra.mrb[0].mxu0 %v457
      %v572 = vpop.f32.mrb[0].mxu0
      %v573 = vadd.f32 0.0, %v572
      %v574 = vpop.f32.mrb[0].mxu0
      %v575 = vpop.f32.mrb[0].mxu0
      %v576 = vadd.f32 0.0, %v575
      %v577 = vpop.f32.mrb[0].mxu0
      %578 = vmatprep.mubr.bf16.mxu0 0
      %579 = vmatmul.mubr.bf16.gmra.mrb[0].mxu0 %v460
      %v580 = vpop.f32.mrb[0].mxu0
      %v581 = vadd.f32 0.0, %v580
      %v582 = vpop.f32.mrb[0].mxu0
      %v583 = vpop.f32.mrb[0].mxu0
      %v584 = vadd.f32 0.0, %v583
      %v585 = vpop.f32.mrb[0].mxu0
      %586 = vmatprep.mubr.bf16.mxu0 0
      %587 = vmatmul.mubr.bf16.gmra.mrb[0].mxu0 %v463
      %v588 = vpop.f32.mrb[0].mxu0
      %v589 = vadd.f32 0.0, %v588
      %v590 = vpop.f32.mrb[0].mxu0
      %v591 = vpop.f32.mrb[0].mxu0
      %v592 = vadd.f32 0.0, %v591
      %v593 = vpop.f32.mrb[0].mxu0
      %594 = vmatprep.mubr.bf16.mxu0 0
      %595 = vmatmul.mubr.bf16.gmra.mrb[0].mxu0 %v466
      %v596 = vpop.f32.mrb[0].mxu0
      %v597 = vadd.f32 0.0, %v596
      %v598 = vpop.f32.mrb[0].mxu0
      %v599 = vpop.f32.mrb[0].mxu0
      %v600 = vadd.f32 0.0, %v599
      %v601 = vpop.f32.mrb[0].mxu0
      %602 = vmatprep.mubr.bf16.mxu0 0
      %603 = vmatmul.mubr.bf16.gmra.mrb[0].mxu0 %v469
      %v604 = vpop.f32.mrb[0].mxu0
      %v605 = vadd.f32 0.0, %v604
      %v606 = vpop.f32.mrb[0].mxu0
      %v607 = vpop.f32.mrb[0].mxu0
      %v608 = vadd.f32 0.0, %v607
      %v609 = vpop.f32.mrb[0].mxu0
      %610 = vmatprep.mubr.bf16.mxu0 0
      %611 = vmatmul.mubr.bf16.gmra.mrb[0].mxu0 %v472
      %v612 = vpop.f32.mrb[0].mxu0
      %v613 = vadd.f32 0.0, %v612
      %v614 = vpop.f32.mrb[0].mxu0
      %v615 = vpop.f32.mrb[0].mxu0
      %v616 = vadd.f32 0.0, %v615
      %v617 = vpop.f32.mrb[0].mxu0
      %618 = vmatprep.mubr.bf16.mxu0 0
      %619 = vmatmul.mubr.bf16.gmra.mrb[0].mxu0 %v475
      %v620 = vpop.f32.mrb[0].mxu0
      %v621 = vadd.f32 0.0, %v620
      %v622 = vpop.f32.mrb[0].mxu0
      %v623 = vpop.f32.mrb[0].mxu0
      %v624 = vadd.f32 0.0, %v623
      %v625 = vpop.f32.mrb[0].mxu0
      %626 = vmatprep.mubr.bf16.mxu0 0
      %627 = vmatmul.mubr.bf16.gmra.mrb[0].mxu0 %v478
      %v628 = vpop.f32.mrb[0].mxu0
      %v629 = vadd.f32 0.0, %v628
      %v630 = vpop.f32.mrb[0].mxu0
      %v631 = vpop.f32.mrb[0].mxu0
      %v632 = vadd.f32 0.0, %v631
      %v633 = vpop.f32.mrb[0].mxu0
      %634 = vmatprep.mubr.bf16.mxu0 0
      %635 = vmatmul.mubr.bf16.gmra.mrb[0].mxu0 %v481
      %v636 = vpop.f32.mrb[0].mxu0
      %v637 = vadd.f32 0.0, %v636
      %v638 = vpop.f32.mrb[0].mxu0
      %v639 = vpop.f32.mrb[0].mxu0
      %v640 = vadd.f32 0.0, %v639
      %v641 = vpop.f32.mrb[0].mxu0
      %642 = vmatprep.mubr.bf16.mxu0 0
      %643 = vmatmul.mubr.bf16.gmra.mrb[0].mxu0 %v484
      %v644 = vpop.f32.mrb[0].mxu0
      %v645 = vadd.f32 0.0, %v644
      %v646 = vpop.f32.mrb[0].mxu0
      %v647 = vpop.f32.mrb[0].mxu0
      %v648 = vadd.f32 0.0, %v647
      %v649 = vpop.f32.mrb[0].mxu0
      %650 = vdwg.mxu0
      %v651 = vadd.f32 %v292, %v525
      %v652 = vadd.f32 %v293, %v528
      %v653 = vadd.f32 %v294, %v533
      %v654 = vadd.f32 %v295, %v536
      %v655 = vadd.f32 %v296, %v541
      %v656 = vadd.f32 %v297, %v544
      %v657 = vadd.f32 %v298, %v549
      %v658 = vadd.f32 %v299, %v552
      %v659 = vadd.f32 %v300, %v557
      %v660 = vadd.f32 %v301, %v560
      %v661 = vadd.f32 %v302, %v565
      %v662 = vadd.f32 %v303, %v568
      %v663 = vadd.f32 %v304, %v573
      %v664 = vadd.f32 %v305, %v576
      %v665 = vadd.f32 %v306, %v581
      %v666 = vadd.f32 %v307, %v584
      %v667 = vadd.f32 %v308, %v589
      %v668 = vadd.f32 %v309, %v592
      %v669 = vadd.f32 %v310, %v597
      %v670 = vadd.f32 %v311, %v600
      %v671 = vadd.f32 %v312, %v605
      %v672 = vadd.f32 %v313, %v608
      %v673 = vadd.f32 %v314, %v613
      %v674 = vadd.f32 %v315, %v616
      %v675 = vadd.f32 %v316, %v621
      %v676 = vadd.f32 %v317, %v624
      %v677 = vadd.f32 %v318, %v629
      %v678 = vadd.f32 %v319, %v632
      %v679 = vadd.f32 %v320, %v637
      %v680 = vadd.f32 %v321, %v640
      %v681 = vadd.f32 %v322, %v645
      %v682 = vadd.f32 %v323, %v648
      %vm683 = vcmask 261120
      %684 = vst.msk [vmem:[#allocation2] sm:$0xff] %vm683, %v651
      %685 = vst.msk [vmem:[#allocation2 + $0x8] sm:$0xff] %vm683, %v652
      %686 = vst.msk [vmem:[#allocation2 + $0x10] sm:$0xff] %vm683, %v653
      %687 = vst.msk [vmem:[#allocation2 + $0x18] sm:$0xff] %vm683, %v654
      %688 = vst.msk [vmem:[#allocation2 + $0x20] sm:$0xff] %vm683, %v655
      %689 = vst.msk [vmem:[#allocation2 + $0x28] sm:$0xff] %vm683, %v656
      %690 = vst.msk [vmem:[#allocation2 + $0x30] sm:$0xff] %vm683, %v657
      %691 = vst.msk [vmem:[#allocation2 + $0x38] sm:$0xff] %vm683, %v658
      %692 = vst.msk [vmem:[#allocation2 + $0x40] sm:$0xff] %vm683, %v659
      %693 = vst.msk [vmem:[#allocation2 + $0x48] sm:$0xff] %vm683, %v660
      %694 = vst.msk [vmem:[#allocation2 + $0x50] sm:$0xff] %vm683, %v661
      %695 = vst.msk [vmem:[#allocation2 + $0x58] sm:$0xff] %vm683, %v662
      %696 = vst.msk [vmem:[#allocation2 + $0x60] sm:$0xff] %vm683, %v663
      %697 = vst.msk [vmem:[#allocation2 + $0x68] sm:$0xff] %vm683, %v664
      %698 = vst.msk [vmem:[#allocation2 + $0x70] sm:$0xff] %vm683, %v665
      %699 = vst.msk [vmem:[#allocation2 + $0x78] sm:$0xff] %vm683, %v666
      %700 = vst.msk [vmem:[#allocation2 + $0x80] sm:$0xff] %vm683, %v667
      %701 = vst.msk [vmem:[#allocation2 + $0x88] sm:$0xff] %vm683, %v668
      %702 = vst.msk [vmem:[#allocation2 + $0x90] sm:$0xff] %vm683, %v669
      %703 = vst.msk [vmem:[#allocation2 + $0x98] sm:$0xff] %vm683, %v670
      %704 = vst.msk [vmem:[#allocation2 + $0xa0] sm:$0xff] %vm683, %v671
      %705 = vst.msk [vmem:[#allocation2 + $0xa8] sm:$0xff] %vm683, %v672
      %706 = vst.msk [vmem:[#allocation2 + $0xb0] sm:$0xff] %vm683, %v673
      %707 = vst.msk [vmem:[#allocation2 + $0xb8] sm:$0xff] %vm683, %v674
      %708 = vst.msk [vmem:[#allocation2 + $0xc0] sm:$0xff] %vm683, %v675
      %709 = vst.msk [vmem:[#allocation2 + $0xc8] sm:$0xff] %vm683, %v676
      %710 = vst.msk [vmem:[#allocation2 + $0xd0] sm:$0xff] %vm683, %v677
      %711 = vst.msk [vmem:[#allocation2 + $0xd8] sm:$0xff] %vm683, %v678
      %712 = vst.msk [vmem:[#allocation2 + $0xe0] sm:$0xff] %vm683, %v679
      %713 = vst.msk [vmem:[#allocation2 + $0xe8] sm:$0xff] %vm683, %v680
      %714 = vst.msk [vmem:[#allocation2 + $0xf0] sm:$0xff] %vm683, %v681
      %715 = vst.msk [vmem:[#allocation2 + $0xf8] sm:$0xff] %vm683, %v682
      // Predicated region
      $region37: #{tpu_custom_call.1} parent=31 // pred_check
        %p716 = pneg %p255
      $region38: #{tpu_custom_call.1} parent=31 // pred_check_branch
        %718 = sbr.rel (%p716) target = $region40
      $region39: #{tpu_custom_call.1} parent=31 // pred_region
        %v719 = vld [vmem:[#allocation2] sm:$0xff]
        %v720 = vld [vmem:[#allocation2 + $0x8] sm:$0xff]
        %v721 = vld [vmem:[#allocation2 + $0x10] sm:$0xff]
        %v722 = vld [vmem:[#allocation2 + $0x18] sm:$0xff]
        %v723 = vld [vmem:[#allocation2 + $0x20] sm:$0xff]
        %v724 = vld [vmem:[#allocation2 + $0x28] sm:$0xff]
        %v725 = vld [vmem:[#allocation2 + $0x30] sm:$0xff]
        %v726 = vld [vmem:[#allocation2 + $0x38] sm:$0xff]
        %v727 = vld [vmem:[#allocation2 + $0x40] sm:$0xff]
        %v728 = vld [vmem:[#allocation2 + $0x48] sm:$0xff]
        %v729 = vld [vmem:[#allocation2 + $0x50] sm:$0xff]
        %v730 = vld [vmem:[#allocation2 + $0x58] sm:$0xff]
        %v731 = vld [vmem:[#allocation2 + $0x60] sm:$0xff]
        %v732 = vld [vmem:[#allocation2 + $0x68] sm:$0xff]
        %v733 = vld [vmem:[#allocation2 + $0x70] sm:$0xff]
        %v734 = vld [vmem:[#allocation2 + $0x78] sm:$0xff]
        %v735 = vld [vmem:[#allocation2 + $0x80] sm:$0xff]
        %v736 = vld [vmem:[#allocation2 + $0x88] sm:$0xff]
        %v737 = vld [vmem:[#allocation2 + $0x90] sm:$0xff]
        %v738 = vld [vmem:[#allocation2 + $0x98] sm:$0xff]
        %v739 = vld [vmem:[#allocation2 + $0xa0] sm:$0xff]
        %v740 = vld [vmem:[#allocation2 + $0xa8] sm:$0xff]
        %v741 = vld [vmem:[#allocation2 + $0xb0] sm:$0xff]
        %v742 = vld [vmem:[#allocation2 + $0xb8] sm:$0xff]
        %v743 = vld [vmem:[#allocation2 + $0xc0] sm:$0xff]
        %v744 = vld [vmem:[#allocation2 + $0xc8] sm:$0xff]
        %v745 = vld [vmem:[#allocation2 + $0xd0] sm:$0xff]
        %v746 = vld [vmem:[#allocation2 + $0xd8] sm:$0xff]
        %v747 = vld [vmem:[#allocation2 + $0xe0] sm:$0xff]
        %v748 = vld [vmem:[#allocation2 + $0xe8] sm:$0xff]
        %v749 = vld [vmem:[#allocation2 + $0xf0] sm:$0xff]
        %v750 = vld [vmem:[#allocation2 + $0xf8] sm:$0xff]
        %v751 = vld [vmem:[%s244] sm:$0x1]
        %v753 = vlaneseq
        %v754 = vshrl.u32 %v753, 7
        %v755 = vsub.s32 0, %v754
        %v756 = vrot.slane %v751, %v755
        %v758 = vadd.f32 %v719, %v756
        %v759 = vadd.f32 %v720, %v756
        %v760 = vadd.f32 %v721, %v756
        %v761 = vadd.f32 %v722, %v756
        %v762 = vadd.f32 %v723, %v756
        %v763 = vadd.f32 %v724, %v756
        %v764 = vadd.f32 %v725, %v756
        %v765 = vadd.f32 %v726, %v756
        %v766 = vadd.f32 %v727, %v756
        %v767 = vadd.f32 %v728, %v756
        %v768 = vadd.f32 %v729, %v756
        %v769 = vadd.f32 %v730, %v756
        %v770 = vadd.f32 %v731, %v756
        %v771 = vadd.f32 %v732, %v756
        %v772 = vadd.f32 %v733, %v756
        %v773 = vadd.f32 %v734, %v756
        %v774 = vadd.f32 %v735, %v756
        %v775 = vadd.f32 %v736, %v756
        %v776 = vadd.f32 %v737, %v756
        %v777 = vadd.f32 %v738, %v756
        %v778 = vadd.f32 %v739, %v756
        %v779 = vadd.f32 %v740, %v756
        %v780 = vadd.f32 %v741, %v756
        %v781 = vadd.f32 %v742, %v756
        %v782 = vadd.f32 %v743, %v756
        %v783 = vadd.f32 %v744, %v756
        %v784 = vadd.f32 %v745, %v756
        %v785 = vadd.f32 %v746, %v756
        %v786 = vadd.f32 %v747, %v756
        %v787 = vadd.f32 %v748, %v756
        %v788 = vadd.f32 %v749, %v756
        %v789 = vadd.f32 %v750, %v756
        %v790 = vmax.f32 %v758, 0.0
        %v791 = vmax.f32 %v759, 0.0
        %v792 = vmax.f32 %v760, 0.0
        %v793 = vmax.f32 %v761, 0.0
        %v794 = vmax.f32 %v762, 0.0
        %v795 = vmax.f32 %v763, 0.0
        %v796 = vmax.f32 %v764, 0.0
        %v797 = vmax.f32 %v765, 0.0
        %v798 = vmax.f32 %v766, 0.0
        %v799 = vmax.f32 %v767, 0.0
        %v800 = vmax.f32 %v768, 0.0
        %v801 = vmax.f32 %v769, 0.0
        %v802 = vmax.f32 %v770, 0.0
        %v803 = vmax.f32 %v771, 0.0
        %v804 = vmax.f32 %v772, 0.0
        %v805 = vmax.f32 %v773, 0.0
        %v806 = vmax.f32 %v774, 0.0
        %v807 = vmax.f32 %v775, 0.0
        %v808 = vmax.f32 %v776, 0.0
        %v809 = vmax.f32 %v777, 0.0
        %v810 = vmax.f32 %v778, 0.0
        %v811 = vmax.f32 %v779, 0.0
        %v812 = vmax.f32 %v780, 0.0
        %v813 = vmax.f32 %v781, 0.0
        %v814 = vmax.f32 %v782, 0.0
        %v815 = vmax.f32 %v783, 0.0
        %v816 = vmax.f32 %v784, 0.0
        %v817 = vmax.f32 %v785, 0.0
        %v818 = vmax.f32 %v786, 0.0
        %v819 = vmax.f32 %v787, 0.0
        %v820 = vmax.f32 %v788, 0.0
        %v821 = vmax.f32 %v789, 0.0
        %v822 = vpack.c.bf16 %v791, %v790
        %v823 = vpack.c.bf16 %v793, %v792
        %v824 = vpack.c.bf16 %v795, %v794
        %v825 = vpack.c.bf16 %v797, %v796
        %v826 = vpack.c.bf16 %v799, %v798
        %v827 = vpack.c.bf16 %v801, %v800
        %v828 = vpack.c.bf16 %v803, %v802
        %v829 = vpack.c.bf16 %v805, %v804
        %v830 = vpack.c.bf16 %v807, %v806
        %v831 = vpack.c.bf16 %v809, %v808
        %v832 = vpack.c.bf16 %v811, %v810
        %v833 = vpack.c.bf16 %v813, %v812
        %v834 = vpack.c.bf16 %v815, %v814
        %v835 = vpack.c.bf16 %v817, %v816
        %v836 = vpack.c.bf16 %v819, %v818
        %v837 = vpack.c.bf16 %v821, %v820
        %v854 = vunpack.c.l.b16 %v822
        %v855 = vunpack.c.h.b16 %v822
        %v856 = vunpack.c.l.b16 %v823
        %v857 = vunpack.c.h.b16 %v823
        %v858 = vunpack.c.l.b16 %v824
        %v859 = vunpack.c.h.b16 %v824
        %v860 = vunpack.c.l.b16 %v825
        %v861 = vunpack.c.h.b16 %v825
        %v862 = vunpack.c.l.b16 %v826
        %v863 = vunpack.c.h.b16 %v826
        %v864 = vunpack.c.l.b16 %v827
        %v865 = vunpack.c.h.b16 %v827
        %v866 = vunpack.c.l.b16 %v828
        %v867 = vunpack.c.h.b16 %v828
        %v868 = vunpack.c.l.b16 %v829
        %v869 = vunpack.c.h.b16 %v829
        %v870 = vunpack.c.l.b16 %v830
        %v871 = vunpack.c.h.b16 %v830
        %v872 = vunpack.c.l.b16 %v831
        %v873 = vunpack.c.h.b16 %v831
        %v874 = vunpack.c.l.b16 %v832
        %v875 = vunpack.c.h.b16 %v832
        %v876 = vunpack.c.l.b16 %v833
        %v877 = vunpack.c.h.b16 %v833
        %v878 = vunpack.c.l.b16 %v834
        %v879 = vunpack.c.h.b16 %v834
        %v880 = vunpack.c.l.b16 %v835
        %v881 = vunpack.c.h.b16 %v835
        %v882 = vunpack.c.l.b16 %v836
        %v883 = vunpack.c.h.b16 %v836
        %v884 = vunpack.c.l.b16 %v837
        %v885 = vunpack.c.h.b16 %v837
        %v886 = vpack.c.b16 %v854, %v854
        %v887 = vpack.c.b16 %v855, %v855
        %v888 = vpack.c.b16 %v856, %v856
        %v889 = vpack.c.b16 %v857, %v857
        %v890 = vpack.c.b16 %v858, %v858
        %v891 = vpack.c.b16 %v859, %v859
        %v892 = vpack.c.b16 %v860, %v860
        %v893 = vpack.c.b16 %v861, %v861
        %v894 = vpack.c.b16 %v862, %v862
        %v895 = vpack.c.b16 %v863, %v863
        %v896 = vpack.c.b16 %v864, %v864
        %v897 = vpack.c.b16 %v865, %v865
        %v898 = vpack.c.b16 %v866, %v866
        %v899 = vpack.c.b16 %v867, %v867
        %v900 = vpack.c.b16 %v868, %v868
        %v901 = vpack.c.b16 %v869, %v869
        %v902 = vpack.c.b16 %v870, %v870
        %v903 = vpack.c.b16 %v871, %v871
        %v904 = vpack.c.b16 %v872, %v872
        %v905 = vpack.c.b16 %v873, %v873
        %v906 = vpack.c.b16 %v874, %v874
        %v907 = vpack.c.b16 %v875, %v875
        %v908 = vpack.c.b16 %v876, %v876
        %v909 = vpack.c.b16 %v877, %v877
        %v910 = vpack.c.b16 %v878, %v878
        %v911 = vpack.c.b16 %v879, %v879
        %v912 = vpack.c.b16 %v880, %v880
        %v913 = vpack.c.b16 %v881, %v881
        %v914 = vpack.c.b16 %v882, %v882
        %v915 = vpack.c.b16 %v883, %v883
        %v916 = vpack.c.b16 %v884, %v884
        %v917 = vpack.c.b16 %v885, %v885
        %vm950 = vcmask 257024
        %951 = vst.msk [vmem:[%s252] sm:$0xf] %vm950, %v886
        %952 = vst.msk [vmem:[%s252 + $0x4] sm:$0xf] %vm950, %v887
        %953 = vst.msk [vmem:[%s252 + $0x8] sm:$0xf] %vm950, %v888
        %954 = vst.msk [vmem:[%s252 + $0xc] sm:$0xf] %vm950, %v889
        %955 = vst.msk [vmem:[%s252 + $0x10] sm:$0xf] %vm950, %v890
        %956 = vst.msk [vmem:[%s252 + $0x14] sm:$0xf] %vm950, %v891
        %957 = vst.msk [vmem:[%s252 + $0x18] sm:$0xf] %vm950, %v892
        %958 = vst.msk [vmem:[%s252 + $0x1c] sm:$0xf] %vm950, %v893
        %959 = vst.msk [vmem:[%s252 + $0x20] sm:$0xf] %vm950, %v894
        %960 = vst.msk [vmem:[%s252 + $0x24] sm:$0xf] %vm950, %v895
        %961 = vst.msk [vmem:[%s252 + $0x28] sm:$0xf] %vm950, %v896
        %962 = vst.msk [vmem:[%s252 + $0x2c] sm:$0xf] %vm950, %v897
        %963 = vst.msk [vmem:[%s252 + $0x30] sm:$0xf] %vm950, %v898
        %964 = vst.msk [vmem:[%s252 + $0x34] sm:$0xf] %vm950, %v899
        %965 = vst.msk [vmem:[%s252 + $0x38] sm:$0xf] %vm950, %v900
        %966 = vst.msk [vmem:[%s252 + $0x3c] sm:$0xf] %vm950, %v901
        %967 = vst.msk [vmem:[%s252 + $0x40] sm:$0xf] %vm950, %v902
        %968 = vst.msk [vmem:[%s252 + $0x44] sm:$0xf] %vm950, %v903
        %969 = vst.msk [vmem:[%s252 + $0x48] sm:$0xf] %vm950, %v904
        %970 = vst.msk [vmem:[%s252 + $0x4c] sm:$0xf] %vm950, %v905
        %971 = vst.msk [vmem:[%s252 + $0x50] sm:$0xf] %vm950, %v906
        %972 = vst.msk [vmem:[%s252 + $0x54] sm:$0xf] %vm950, %v907
        %973 = vst.msk [vmem:[%s252 + $0x58] sm:$0xf] %vm950, %v908
        %974 = vst.msk [vmem:[%s252 + $0x5c] sm:$0xf] %vm950, %v909
        %975 = vst.msk [vmem:[%s252 + $0x60] sm:$0xf] %vm950, %v910
        %976 = vst.msk [vmem:[%s252 + $0x64] sm:$0xf] %vm950, %v911
        %977 = vst.msk [vmem:[%s252 + $0x68] sm:$0xf] %vm950, %v912
        %978 = vst.msk [vmem:[%s252 + $0x6c] sm:$0xf] %vm950, %v913
        %979 = vst.msk [vmem:[%s252 + $0x70] sm:$0xf] %vm950, %v914
        %980 = vst.msk [vmem:[%s252 + $0x74] sm:$0xf] %vm950, %v915
        %981 = vst.msk [vmem:[%s252 + $0x78] sm:$0xf] %vm950, %v916
        %982 = vst.msk [vmem:[%s252 + $0x7c] sm:$0xf] %vm950, %v917
      $region40: #{tpu_custom_call.1} parent=31 // pred_fallthru
        _
      %s983 = smul.u32 32, %s19
      %p984 = scmp.lt.s32.totalorder %s983, 63
      %s985 = scalar_select %p984, %s983, 63
      %p986 = scmp.lt.s32.totalorder %s20, 0
      %s987 = scalar_select %p986, %s20, 0
      %s988 = sadd.s32 %s987, %s985
      %s989 = smul.addr %s988, 4
      %s990 = scalar_lea.vmem %s3, %s989
      // Predicated region
      $region41: #{tpu_custom_call.1} parent=31 // pred_check
        %p991 = pneg %p135
      $region42: #{tpu_custom_call.1} parent=31 // pred_check_branch
        %993 = sbr.rel (%p991) target = $region44
      $region43: #{tpu_custom_call.1} parent=31 // pred_region
        %s994 = smul.u32 32, %s19
      $region44: #{tpu_custom_call.1} parent=31 // pred_fallthru
        _
    $region32: #{tpu_custom_call.1} parent=5 // pred_fallthru
      _
    %p995 = scmp.le.s32.totalorder 2, %s9
    // Predicated region
    $region45: #{tpu_custom_call.1} parent=5 // pred_check
      %p996 = pneg %p995
    $region46: #{tpu_custom_call.1} parent=5 // pred_check_branch
      %998 = sbr.rel (%p996) target = $region48
    $region47: #{tpu_custom_call.1} parent=5 // pred_region
      %s999 = ssub.s32 %s9, 2
      // Predicated region
      $region49: #{tpu_custom_call.1} parent=47 // pred_check
        %p1000 = pneg %p141
      $region50: #{tpu_custom_call.1} parent=47 // pred_check_branch
        %1002 = sbr.rel (%p1000) target = $region52
      $region51: #{tpu_custom_call.1} parent=47 // pred_region
        %s1003 = smul.u32 32, %s22
        %p1004 = scmp.lt.s32.totalorder %s1003, 63
        %s1005 = scalar_select %p1004, %s1003, 63
        %p1006 = scmp.lt.s32.totalorder %s23, 0
        %s1007 = scalar_select %p1006, %s23, 0
        %s1008 = sadd.s32 %s1007, %s1005
        %s1009 = smul.addr %s1008, 4
        %s1010 = scalar_lea.vmem %s3, %s1009
      $region52: #{tpu_custom_call.1} parent=47 // pred_fallthru
        _
    $region48: #{tpu_custom_call.1} parent=5 // pred_fallthru
      _
  $region6: #{tpu_custom_call.1} parent=0 // loop_footer
    %s13 = sadd.s32 1, %s9
  $region7: #{tpu_custom_call.1} parent=0 // loop_footer_branch
    %8 = sbr.rel target = $region3
  $region8: #{tpu_custom_call.1} parent=0 // loop_exit
    _

</llo_original>
